<compile_context>
chip_gen: v7x
topology: tpu7x:2x2x1
jax: 0.10.0
libtpu: 0.0.40
codegen_flags: <defaults>
</compile_context>

<pallas_src>
import jax
import jax.numpy as jnp
from jax.experimental import pallas as pl
from jax.experimental.pallas import tpu as pltpu

_SUBLANE = 8
_MATMUL_DTYPE = jnp.bfloat16  # MXU-native operand dtype; f32 accumulation kept.


def _round_up(n, m):
    return ((n + m - 1) // m) * m


def _default_elementwise_dtype():
    """bf16 bias-add/tanh on chips with bf16 VALU+EUP (v6e/v7x); f32 otherwise."""
    try:
        kind = jax.devices()[0].device_kind.lower()
    except Exception:
        return jnp.float32
    for old in ("v2", "v3", "v4", "v5"):
        if old in kind:
            return jnp.float32
    return jnp.bfloat16


def _decoder_kernel(x_ref,
                    w1_ref, b1_ref,
                    w2_ref, b2_ref,
                    w3_ref, b3_ref,
                    w4_ref, b4_ref,
                    o_ref):
    """Whole 4-layer MLP for one batch tile; weights stay VMEM-resident."""

    def hidden(h, w_ref, b_ref):
        # bf16 MXU operands, f32 accumulation; bias-add + tanh run in the
        # bias dtype (bf16 on v6e/v7x, f32 on v5e).
        acc = jnp.dot(h.astype(_MATMUL_DTYPE), w_ref[...],
                      preferred_element_type=jnp.float32)
        return jnp.tanh(acc.astype(b_ref.dtype) + b_ref[...])

    h = hidden(x_ref[...], w1_ref, b1_ref)        # Linear(latent, 32) + Tanh
    h = hidden(h, w2_ref, b2_ref)                 # Linear(32, 64)     + Tanh
    h = hidden(h, w3_ref, b3_ref)                 # Linear(64, 128)    + Tanh
    acc = jnp.dot(h.astype(_MATMUL_DTYPE), w4_ref[...],
                  preferred_element_type=jnp.float32)
    o_ref[...] = (acc + b4_ref[...]).astype(o_ref.dtype)  # Linear(128, origin)


def prepare_decoder_params(params, elementwise_dtype=None):
    """One-time prep (call once, reuse across forwards): cast weights to bf16,
    reshape biases to (1, out); hidden biases in the elementwise dtype, final
    bias stays f32."""
    if elementwise_dtype is None:
        elementwise_dtype = _default_elementwise_dtype()
    prepped = []
    n = len(params)
    for i, (w, b) in enumerate(params):
        b_dtype = jnp.float32 if i == n - 1 else elementwise_dtype
        prepped.append((
            jnp.asarray(w, _MATMUL_DTYPE),
            jnp.asarray(b, jnp.float32).reshape(1, -1).astype(b_dtype),
        ))
    return prepped


def decoder_forward(x, prepped_params, *, tile_b=None):
    """x: (B, latent_dim) float32. prepped_params: output of prepare_decoder_params."""
    B, latent = x.shape
    origin_dim = prepped_params[-1][0].shape[1]

    if tile_b is None:
        # ~1024-2048 rows/tile amortizes the ~0.35us/step overhead while the
        # double-buffered footprint stays in the low-MiB range (fine even on
        # v7x's 64 MiB VMEM).  Force >=2 grid steps when B allows two
        # sublane-aligned tiles so v7x's two TensorCores both get work.
        n_tiles = max(1, pl.cdiv(B, 2048))
        if B >= 2 * _SUBLANE:
            n_tiles = max(n_tiles, 2)
        tile_b = _round_up(pl.cdiv(B, n_tiles), _SUBLANE)
    else:
        tile_b = _round_up(max(tile_b, _SUBLANE), _SUBLANE)

    b_pad = _round_up(B, tile_b)
    if b_pad != B:
        x = jnp.pad(x, ((0, b_pad - B), (0, 0)))

    grid = (b_pad // tile_b,)

    in_specs = [pl.BlockSpec((tile_b, latent), lambda i: (i, 0))]
    flat_args = [x]
    for w, b in prepped_params:
        # Constant index_maps -> weights/biases remain VMEM-resident across steps.
        in_specs.append(pl.BlockSpec(w.shape, lambda i: (0, 0)))
        in_specs.append(pl.BlockSpec(b.shape, lambda i: (0, 0)))
        flat_args.append(w)
        flat_args.append(b)

    # Output block last dim == full array dim -> no lane padding, no padded
    # HBM write, and no wrapper feature-slice copy.
    out_spec = pl.BlockSpec((tile_b, origin_dim), lambda i: (i, 0))

    flops = sum(2 * b_pad * w.shape[0] * w.shape[1] for w, _ in prepped_params)
    transcendentals = b_pad * sum(w.shape[1] for w, _ in prepped_params[:-1])
    bytes_accessed = (4 * b_pad * (latent + origin_dim)
                      + sum(w.size * w.dtype.itemsize + b.size * b.dtype.itemsize
                            for w, b in prepped_params))

    out = pl.pallas_call(
        _decoder_kernel,
        out_shape=jax.ShapeDtypeStruct((b_pad, origin_dim), jnp.float32),
        grid=grid,
        in_specs=in_specs,
        out_specs=out_spec,
        compiler_params=pltpu.CompilerParams(
            dimension_semantics=("parallel",)),
        cost_estimate=pl.CostEstimate(
            flops=flops,
            transcendentals=transcendentals,
            bytes_accessed=bytes_accessed),
    )(*flat_args)

    # Slice only when the batch was actually padded (feature dim is exact).
    return out if b_pad == B else out[:B]


def init_decoder_params(key, origin_dim, latent_dim):
    """Deterministic synthetic params matching the module's layer shapes.

    PyTorch stores Linear weights as (out, in); we generate in that convention
    and transpose to (in, out) so y = x @ W.T + b is preserved exactly.
    """
    dims = [(latent_dim, 32), (32, 64), (64, 128), (128, origin_dim)]
    params = []
    for d_in, d_out in dims:
        key, kw, kb = jax.random.split(key, 3)
        bound = 1.0 / (d_in ** 0.5)
        w_pt = jax.random.uniform(kw, (d_out, d_in), jnp.float32, -bound, bound)
        b_pt = jax.random.uniform(kb, (d_out,), jnp.float32, -bound, bound)
        params.append((jnp.transpose(w_pt), b_pt))
    return params


def decoder_reference(x, prepped_params):
    """Plain-JAX reference mirroring the kernel numerics (bf16 matmul operands,
    f32 accumulation, elementwise in the bias dtype, f32 final layer)."""
    h = x
    n = len(prepped_params)
    for i, (w, b) in enumerate(prepped_params):
        acc = jnp.dot(h.astype(_MATMUL_DTYPE), w,
                      preferred_element_type=jnp.float32)
        if i < n - 1:
            h = jnp.tanh(acc.astype(b.dtype) + b)
        else:
            h = acc + b
    return h


if __name__ == "__main__":
    key = jax.random.PRNGKey(0)
    batch = 8
    latent_dim = 8
    origin_dim = 64

    key, kx = jax.random.split(key)
    x = jax.random.normal(kx, (batch, latent_dim), jnp.float32)
    params = init_decoder_params(key, origin_dim, latent_dim)
    prepped = prepare_decoder_params(params)   # hoisted out of the forward path

    out = jax.block_until_ready(decoder_forward(x, prepped))
    ref = decoder_reference(x, prepped)
    assert out.shape == (batch, origin_dim)
    assert jnp.allclose(out, ref, atol=2e-2, rtol=2e-2), float(
        jnp.max(jnp.abs(out - ref)))

    # Second case: exercises multi-step grid + batch padding/slicing.
    key, kx2 = jax.random.split(key)
    x2 = jax.random.normal(kx2, (200, latent_dim), jnp.float32)
    out2 = jax.block_until_ready(decoder_forward(x2, prepped, tile_b=64))
    ref2 = decoder_reference(x2, prepped)
    assert out2.shape == (200, origin_dim)
    assert jnp.allclose(out2, ref2, atol=2e-2, rtol=2e-2)

    print("KERNEL_OK")
</pallas_src>

<mosaic_0001>
module attributes {stable_mosaic.version = 11 : i64} {
  func.func @_decoder_kernel(%arg0: i32, %arg1: memref<8x8xf32, #tpu.memory_space<vmem>>, %arg2: memref<8x32xbf16, #tpu.memory_space<vmem>>, %arg3: memref<1x32xbf16, #tpu.memory_space<vmem>>, %arg4: memref<32x64xbf16, #tpu.memory_space<vmem>>, %arg5: memref<1x64xbf16, #tpu.memory_space<vmem>>, %arg6: memref<64x128xbf16, #tpu.memory_space<vmem>>, %arg7: memref<1x128xbf16, #tpu.memory_space<vmem>>, %arg8: memref<128x64xbf16, #tpu.memory_space<vmem>>, %arg9: memref<1x64xf32, #tpu.memory_space<vmem>>, %arg10: memref<8x64xf32, #tpu.memory_space<vmem>>) attributes {dimension_semantics = [#tpu.dimension_semantics<parallel>], iteration_bounds = array<i64: 1>, scalar_prefetch = 0 : i64, scratch_operands = 0 : i64, tpu.core_type = #tpu.core_type<tc>, window_params = [{transform_indices = @transform_0, window_bounds = array<i64: 8, 8>}, {pipeline_mode = #tpu.pipeline_mode<synchronous>, transform_indices = @transform_1, window_bounds = array<i64: 8, 32>}, {pipeline_mode = #tpu.pipeline_mode<synchronous>, transform_indices = @transform_2, window_bounds = array<i64: 1, 32>}, {pipeline_mode = #tpu.pipeline_mode<synchronous>, transform_indices = @transform_3, window_bounds = array<i64: 32, 64>}, {pipeline_mode = #tpu.pipeline_mode<synchronous>, transform_indices = @transform_4, window_bounds = array<i64: 1, 64>}, {pipeline_mode = #tpu.pipeline_mode<synchronous>, transform_indices = @transform_5, window_bounds = array<i64: 64, 128>}, {pipeline_mode = #tpu.pipeline_mode<synchronous>, transform_indices = @transform_6, window_bounds = array<i64: 1, 128>}, {pipeline_mode = #tpu.pipeline_mode<synchronous>, transform_indices = @transform_7, window_bounds = array<i64: 128, 64>}, {pipeline_mode = #tpu.pipeline_mode<synchronous>, transform_indices = @transform_8, window_bounds = array<i64: 1, 64>}, {transform_indices = @transform_9, window_bounds = array<i64: 8, 64>}]} {
    %c0 = arith.constant 0 : index
    %c0_0 = arith.constant 0 : index
    %0 = vector.load %arg1[%c0, %c0_0] : memref<8x8xf32, #tpu.memory_space<vmem>>, vector<8x8xf32>
    %1 = arith.truncf %0 : vector<8x8xf32> to vector<8x8xbf16>
    %c0_1 = arith.constant 0 : index
    %c0_2 = arith.constant 0 : index
    %2 = vector.load %arg2[%c0_1, %c0_2] : memref<8x32xbf16, #tpu.memory_space<vmem>>, vector<8x32xbf16>
    %cst = arith.constant dense<0.000000e+00> : vector<8x32xf32>
    %3 = tpu.matmul %1, %2, %cst {dimension_numbers = #tpu.dot_dimension_numbers<[1], [0], [0], [1], [0, 0, 1, 1], [], []>} : vector<8x8xbf16>, vector<8x32xbf16>, vector<8x32xf32> -> vector<8x32xf32>
    %4 = arith.truncf %3 : vector<8x32xf32> to vector<8x32xbf16>
    %c0_3 = arith.constant 0 : index
    %c0_4 = arith.constant 0 : index
    %5 = vector.load %arg3[%c0_3, %c0_4] : memref<1x32xbf16, #tpu.memory_space<vmem>>, vector<1x32xbf16>
    %6 = vector.broadcast %5 : vector<1x32xbf16> to vector<8x32xbf16>
    %7 = arith.addf %4, %6 : vector<8x32xbf16>
    %8 = math.tanh %7 : vector<8x32xbf16>
    %c0_5 = arith.constant 0 : index
    %c0_6 = arith.constant 0 : index
    %9 = vector.load %arg4[%c0_5, %c0_6] : memref<32x64xbf16, #tpu.memory_space<vmem>>, vector<32x64xbf16>
    %cst_7 = arith.constant dense<0.000000e+00> : vector<8x64xf32>
    %10 = tpu.matmul %8, %9, %cst_7 {dimension_numbers = #tpu.dot_dimension_numbers<[1], [0], [0], [1], [0, 0, 1, 1], [], []>} : vector<8x32xbf16>, vector<32x64xbf16>, vector<8x64xf32> -> vector<8x64xf32>
    %11 = arith.truncf %10 : vector<8x64xf32> to vector<8x64xbf16>
    %c0_8 = arith.constant 0 : index
    %c0_9 = arith.constant 0 : index
    %12 = vector.load %arg5[%c0_8, %c0_9] : memref<1x64xbf16, #tpu.memory_space<vmem>>, vector<1x64xbf16>
    %13 = vector.broadcast %12 : vector<1x64xbf16> to vector<8x64xbf16>
    %14 = arith.addf %11, %13 : vector<8x64xbf16>
    %15 = math.tanh %14 : vector<8x64xbf16>
    %c0_10 = arith.constant 0 : index
    %c0_11 = arith.constant 0 : index
    %16 = vector.load %arg6[%c0_10, %c0_11] : memref<64x128xbf16, #tpu.memory_space<vmem>>, vector<64x128xbf16>
    %cst_12 = arith.constant dense<0.000000e+00> : vector<8x128xf32>
    %17 = tpu.matmul %15, %16, %cst_12 {dimension_numbers = #tpu.dot_dimension_numbers<[1], [0], [0], [1], [0, 0, 1, 1], [], []>} : vector<8x64xbf16>, vector<64x128xbf16>, vector<8x128xf32> -> vector<8x128xf32>
    %18 = arith.truncf %17 : vector<8x128xf32> to vector<8x128xbf16>
    %c0_13 = arith.constant 0 : index
    %c0_14 = arith.constant 0 : index
    %19 = vector.load %arg7[%c0_13, %c0_14] : memref<1x128xbf16, #tpu.memory_space<vmem>>, vector<1x128xbf16>
    %20 = vector.broadcast %19 : vector<1x128xbf16> to vector<8x128xbf16>
    %21 = arith.addf %18, %20 : vector<8x128xbf16>
    %22 = math.tanh %21 : vector<8x128xbf16>
    %c0_15 = arith.constant 0 : index
    %c0_16 = arith.constant 0 : index
    %23 = vector.load %arg8[%c0_15, %c0_16] : memref<128x64xbf16, #tpu.memory_space<vmem>>, vector<128x64xbf16>
    %cst_17 = arith.constant dense<0.000000e+00> : vector<8x64xf32>
    %24 = tpu.matmul %22, %23, %cst_17 {dimension_numbers = #tpu.dot_dimension_numbers<[1], [0], [0], [1], [0, 0, 1, 1], [], []>} : vector<8x128xbf16>, vector<128x64xbf16>, vector<8x64xf32> -> vector<8x64xf32>
    %c0_18 = arith.constant 0 : index
    %c0_19 = arith.constant 0 : index
    %25 = vector.load %arg9[%c0_18, %c0_19] : memref<1x64xf32, #tpu.memory_space<vmem>>, vector<1x64xf32>
    %26 = vector.broadcast %25 : vector<1x64xf32> to vector<8x64xf32>
    %27 = arith.addf %24, %26 : vector<8x64xf32>
    %c0_20 = arith.constant 0 : index
    %c0_21 = arith.constant 0 : index
    %28 = vector.load %arg10[%c0_20, %c0_21] : memref<8x64xf32, #tpu.memory_space<vmem>>, vector<8x64xf32>
    tpu.vector_store %arg10[%c0_20, %c0_21], %27 {strides = array<i32>} : memref<8x64xf32, #tpu.memory_space<vmem>>, vector<8x64xf32>,
    return
  }
  func.func @transform_0(%arg0: i32) -> (i32, i32) {
    %c0_i32 = arith.constant 0 : i32
    %c0_i32_0 = arith.constant 0 : i32
    return %arg0, %c0_i32 : i32, i32
  }
  func.func @transform_1(%arg0: i32) -> (i32, i32) {
    %c0_i32 = arith.constant 0 : i32
    %c0_i32_0 = arith.constant 0 : i32
    %c0_i32_1 = arith.constant 0 : i32
    return %c0_i32, %c0_i32_0 : i32, i32
  }
  func.func @transform_2(%arg0: i32) -> (i32, i32) {
    %c0_i32 = arith.constant 0 : i32
    %c0_i32_0 = arith.constant 0 : i32
    %c0_i32_1 = arith.constant 0 : i32
    return %c0_i32, %c0_i32_0 : i32, i32
  }
  func.func @transform_3(%arg0: i32) -> (i32, i32) {
    %c0_i32 = arith.constant 0 : i32
    %c0_i32_0 = arith.constant 0 : i32
    %c0_i32_1 = arith.constant 0 : i32
    return %c0_i32, %c0_i32_0 : i32, i32
  }
  func.func @transform_4(%arg0: i32) -> (i32, i32) {
    %c0_i32 = arith.constant 0 : i32
    %c0_i32_0 = arith.constant 0 : i32
    %c0_i32_1 = arith.constant 0 : i32
    return %c0_i32, %c0_i32_0 : i32, i32
  }
  func.func @transform_5(%arg0: i32) -> (i32, i32) {
    %c0_i32 = arith.constant 0 : i32
    %c0_i32_0 = arith.constant 0 : i32
    %c0_i32_1 = arith.constant 0 : i32
    return %c0_i32, %c0_i32_0 : i32, i32
  }
  func.func @transform_6(%arg0: i32) -> (i32, i32) {
    %c0_i32 = arith.constant 0 : i32
    %c0_i32_0 = arith.constant 0 : i32
    %c0_i32_1 = arith.constant 0 : i32
    return %c0_i32, %c0_i32_0 : i32, i32
  }
  func.func @transform_7(%arg0: i32) -> (i32, i32) {
    %c0_i32 = arith.constant 0 : i32
    %c0_i32_0 = arith.constant 0 : i32
    %c0_i32_1 = arith.constant 0 : i32
    return %c0_i32, %c0_i32_0 : i32, i32
  }
  func.func @transform_8(%arg0: i32) -> (i32, i32) {
    %c0_i32 = arith.constant 0 : i32
    %c0_i32_0 = arith.constant 0 : i32
    %c0_i32_1 = arith.constant 0 : i32
    return %c0_i32, %c0_i32_0 : i32, i32
  }
  func.func @transform_9(%arg0: i32) -> (i32, i32) {
    %c0_i32 = arith.constant 0 : i32
    %c0_i32_0 = arith.constant 0 : i32
    return %arg0, %c0_i32 : i32, i32
  }
}

</mosaic_0001>

<llo_original>
// kernel: tpu_custom_call.1
$region0: #{tpu_custom_call.1}
  #allocation0 [shape = 'u32[]', space=smem, size = 0x4, offset = 0x4, fixed_abs, tag = 'smem constant byte address 0x4 - core index']
  #allocation1 [shape = 'u32[144,128]{1,0:T(1,128)}', space=vmem, size = 0x12000, scoped, tag = 'internal scratch']
  %s0 = inlined_call_operand.vmem [shape: f32[8,8], index: 0, kind: input, shape index: {}]
  %s1 = inlined_call_operand.vmem [shape: bf16[8,32], index: 1, kind: input, shape index: {}]
  %s2 = inlined_call_operand.vmem [shape: bf16[1,32], index: 2, kind: input, shape index: {}]
  %s3 = inlined_call_operand.vmem [shape: bf16[32,64], index: 3, kind: input, shape index: {}]
  %s4 = inlined_call_operand.vmem [shape: bf16[1,64], index: 4, kind: input, shape index: {}]
  %s5 = inlined_call_operand.vmem [shape: bf16[64,128], index: 5, kind: input, shape index: {}]
  %s6 = inlined_call_operand.vmem [shape: bf16[1,128], index: 6, kind: input, shape index: {}]
  %s7 = inlined_call_operand.vmem [shape: bf16[128,64], index: 7, kind: input, shape index: {}]
  %s8 = inlined_call_operand.vmem [shape: f32[1,64], index: 8, kind: input, shape index: {}]
  %s9 = inlined_call_operand.hbm [shape: f32[8,64], index: 9, kind: output, shape index: {}]
  %s10 = sld [smem:[#allocation0]]
  $region46: #{tpu_custom_call.1} parent=0
    _
  %s12 = ssub.s32 1, %s10
  %s13 = scalar_select 0, %s12, %s10
  $region1: #{tpu_custom_call.1} parent=0
    #allocation2 [shape = 'u8[4096]{0}', space=vmem, size = 0x1000, scoped, tag = 'output window, operand 0, single buffered']
    #allocation3 [shape = 's32[1]{0}', space=sflag, size = 0x4, scoped, tag = 'scoped memory for tpu_custom_call.1']
    %14 = vsyncpa [#allocation3], 0
    // Predicated region
    $region2: #{tpu_custom_call.1} parent=1 // pred_check
      _
    $region3: #{tpu_custom_call.1} parent=1 // pred_check_branch
      %16 = sbr.rel (0) target = $region5
    $region4: #{tpu_custom_call.1} parent=1 // pred_region
      _
    $region5: #{tpu_custom_call.1} parent=1 // pred_fallthru
      _
    // Predicated region
    $region6: #{tpu_custom_call.1} parent=1 // pred_check
      _
    $region7: #{tpu_custom_call.1} parent=1 // pred_check_branch
      %18 = sbr.rel (0) target = $region9
    $region8: #{tpu_custom_call.1} parent=1 // pred_region
      _
    $region9: #{tpu_custom_call.1} parent=1 // pred_fallthru
      _
    // Predicated region
    $region10: #{tpu_custom_call.1} parent=1 // pred_check
      _
    $region11: #{tpu_custom_call.1} parent=1 // pred_check_branch
      %20 = sbr.rel (0) target = $region13
    $region12: #{tpu_custom_call.1} parent=1 // pred_region
      _
    $region13: #{tpu_custom_call.1} parent=1 // pred_fallthru
      _
    // Predicated region
    $region14: #{tpu_custom_call.1} parent=1 // pred_check
      _
    $region15: #{tpu_custom_call.1} parent=1 // pred_check_branch
      %22 = sbr.rel (0) target = $region17
    $region16: #{tpu_custom_call.1} parent=1 // pred_region
      _
    $region17: #{tpu_custom_call.1} parent=1 // pred_fallthru
      _
    // Predicated region
    $region18: #{tpu_custom_call.1} parent=1 // pred_check
      _
    $region19: #{tpu_custom_call.1} parent=1 // pred_check_branch
      %24 = sbr.rel (0) target = $region21
    $region20: #{tpu_custom_call.1} parent=1 // pred_region
      _
    $region21: #{tpu_custom_call.1} parent=1 // pred_fallthru
      _
    // Predicated region
    $region22: #{tpu_custom_call.1} parent=1 // pred_check
      _
    $region23: #{tpu_custom_call.1} parent=1 // pred_check_branch
      %26 = sbr.rel (0) target = $region25
    $region24: #{tpu_custom_call.1} parent=1 // pred_region
      _
    $region25: #{tpu_custom_call.1} parent=1 // pred_fallthru
      _
    // Predicated region
    $region26: #{tpu_custom_call.1} parent=1 // pred_check
      _
    $region27: #{tpu_custom_call.1} parent=1 // pred_check_branch
      %28 = sbr.rel (0) target = $region29
    $region28: #{tpu_custom_call.1} parent=1 // pred_region
      _
    $region29: #{tpu_custom_call.1} parent=1 // pred_fallthru
      _
    // Predicated region
    $region30: #{tpu_custom_call.1} parent=1 // pred_check
      _
    $region31: #{tpu_custom_call.1} parent=1 // pred_check_branch
      %30 = sbr.rel (0) target = $region33
    $region32: #{tpu_custom_call.1} parent=1 // pred_region
      _
    $region33: #{tpu_custom_call.1} parent=1 // pred_fallthru
      _
    // Predicated region
    $region34: #{tpu_custom_call.1} parent=1 // pred_check
      _
    $region35: #{tpu_custom_call.1} parent=1 // pred_check_branch
      %32 = sbr.rel (0) target = $region37
    $region36: #{tpu_custom_call.1} parent=1 // pred_region
      _
    $region37: #{tpu_custom_call.1} parent=1 // pred_fallthru
      _
    %v34 = vld [vmem:[%s0] sm:$0xff]
    %v35 = vpack.c.bf16 %v34, %v34
    %v36 = vld [vmem:[%s1] sm:$0xf]
    %vm37 = vcmask 64512
    %v39 = vsel %vm37, %v35, 0
    %vm41 = vcmask 1043456
    %v43 = vsel %vm41, %v36, 0
    %45 = vmatprep.subr.bf16.mxu0 0
    %46 = vmatpush1.bf16.msra.mxu0 %v43
    %47 = vmatprep.subr.bf16.mxu0 0
    %48 = vmatpush1.bf16.msra.mxu0 0
    %49 = vmatprep.subr.bf16.mxu0 0
    %50 = vmatpush1.bf16.msra.mxu0 0
    %51 = vmatprep.subr.bf16.mxu0 0
    %52 = vmatpush1.bf16.msra.mxu0 0
    %53 = vmatprep.subr.bf16.mxu0 0
    %54 = vmatpush1.bf16.msra.mxu0 0
    %55 = vmatprep.subr.bf16.mxu0 0
    %56 = vmatpush1.bf16.msra.mxu0 0
    %57 = vmatprep.subr.bf16.mxu0 0
    %58 = vmatpush1.bf16.msra.mxu0 0
    %59 = vmatprep.subr.bf16.mxu0 0
    %60 = vmatpush1.bf16.msra.mxu0 0
    %61 = vmatprep.subr.bf16.mxu0 0
    %62 = vmatpush1.bf16.msra.mxu0 0
    %63 = vmatprep.subr.bf16.mxu0 0
    %64 = vmatpush1.bf16.msra.mxu0 0
    %65 = vmatprep.subr.bf16.mxu0 0
    %66 = vmatpush1.bf16.msra.mxu0 0
    %67 = vmatprep.subr.bf16.mxu0 0
    %68 = vmatpush1.bf16.msra.mxu0 0
    %69 = vmatprep.subr.bf16.mxu0 0
    %70 = vmatpush1.bf16.msra.mxu0 0
    %71 = vmatprep.subr.bf16.mxu0 0
    %72 = vmatpush1.bf16.msra.mxu0 0
    %73 = vmatprep.subr.bf16.mxu0 0
    %74 = vmatpush1.bf16.msra.mxu0 0
    %75 = vmatprep.subr.bf16.mxu0 0
    %76 = vmatpush1.bf16.msra.mxu0 0
    %77 = vmatprep.mubr.bf16.mxu0 0
    %78 = vmatmul.mubr.bf16.gmra.mrb[0].mxu0 %v39
    %v79 = vpop.f32.mrb[0].mxu0
    %v80 = vadd.f32 0.0, %v79
    %v81 = vpop.f32.mrb[0].mxu0
    %v82 = vpop.f32.mrb[0].mxu0
    %v83 = vpop.f32.mrb[0].mxu0
    %84 = vdwg.mxu0
    %v85 = vpack.c.bf16 %v80, %v80
    %v86 = vld [vmem:[%s2] sm:$0x1]
    %v88 = vpack.i.b16 %v86, %v86
    %v90 = vlaneseq
    %v91 = vshrl.u32 %v90, 7
    %v92 = vsub.s32 0, %v91
    %v93 = vrot.slane %v88, %v92
    %v94 = vadd.bf16 %v85, %v93
    %v95 = vtanh.bf16.pop %v94
    %v96 = vld [vmem:[%s3] sm:$0xf]
    %v97 = vld [vmem:[%s3 + $0x4] sm:$0xf]
    %v98 = vld [vmem:[%s3 + $0x8] sm:$0xf]
    %v99 = vld [vmem:[%s3 + $0xc] sm:$0xf]
    %v104 = vunpack.c.l.b16 %v96
    %v105 = vunpack.c.l.b16 %v97
    %v106 = vunpack.c.l.b16 %v98
    %v107 = vunpack.c.l.b16 %v99
    %v108 = vpack.c.b16 %v105, %v104
    %v109 = vpack.c.b16 %v107, %v106
    %vm112 = vcmask 261120
    %v114 = vsel %vm112, %v95, 0
    %116 = vmatprep.subr.bf16.mxu0 0
    %117 = vmatpush1.bf16.msra.mxu0 %v108
    %118 = vmatprep.subr.bf16.mxu0 0
    %119 = vmatpush1.bf16.msra.mxu0 %v109
    %120 = vmatprep.subr.bf16.mxu0 0
    %121 = vmatpush1.bf16.msra.mxu0 0
    %122 = vmatprep.subr.bf16.mxu0 0
    %123 = vmatpush1.bf16.msra.mxu0 0
    %124 = vmatprep.subr.bf16.mxu0 0
    %125 = vmatpush1.bf16.msra.mxu0 0
    %126 = vmatprep.subr.bf16.mxu0 0
    %127 = vmatpush1.bf16.msra.mxu0 0
    %128 = vmatprep.subr.bf16.mxu0 0
    %129 = vmatpush1.bf16.msra.mxu0 0
    %130 = vmatprep.subr.bf16.mxu0 0
    %131 = vmatpush1.bf16.msra.mxu0 0
    %132 = vmatprep.subr.bf16.mxu0 0
    %133 = vmatpush1.bf16.msra.mxu0 0
    %134 = vmatprep.subr.bf16.mxu0 0
    %135 = vmatpush1.bf16.msra.mxu0 0
    %136 = vmatprep.subr.bf16.mxu0 0
    %137 = vmatpush1.bf16.msra.mxu0 0
    %138 = vmatprep.subr.bf16.mxu0 0
    %139 = vmatpush1.bf16.msra.mxu0 0
    %140 = vmatprep.subr.bf16.mxu0 0
    %141 = vmatpush1.bf16.msra.mxu0 0
    %142 = vmatprep.subr.bf16.mxu0 0
    %143 = vmatpush1.bf16.msra.mxu0 0
    %144 = vmatprep.subr.bf16.mxu0 0
    %145 = vmatpush1.bf16.msra.mxu0 0
    %146 = vmatprep.subr.bf16.mxu0 0
    %147 = vmatpush1.bf16.msra.mxu0 0
    %148 = vmatprep.mubr.bf16.mxu0 0
    %149 = vmatmul.mubr.bf16.gmra.mrb[0].mxu0 %v114
    %v150 = vpop.f32.mrb[0].mxu0
    %v151 = vadd.f32 0.0, %v150
    %v152 = vpop.f32.mrb[0].mxu0
    %v153 = vpop.f32.mrb[0].mxu0
    %v154 = vpop.f32.mrb[0].mxu0
    %155 = vdwg.mxu0
    %v156 = vpack.c.bf16 %v151, %v151
    %v157 = vld [vmem:[%s4] sm:$0x1]
    %v159 = vpack.i.b16 %v157, %v157
    %v161 = vlaneseq
    %v162 = vshrl.u32 %v161, 7
    %v163 = vsub.s32 0, %v162
    %v164 = vrot.slane %v159, %v163
    %v165 = vadd.bf16 %v156, %v164
    %v166 = vtanh.bf16.pop %v165
    %v167 = vld [vmem:[%s5] sm:$0xf]
    %v168 = vld [vmem:[%s5 + $0x4] sm:$0xf]
    %v169 = vld [vmem:[%s5 + $0x8] sm:$0xf]
    %v170 = vld [vmem:[%s5 + $0xc] sm:$0xf]
    %v171 = vld [vmem:[%s5 + $0x10] sm:$0xf]
    %v172 = vld [vmem:[%s5 + $0x14] sm:$0xf]
    %v173 = vld [vmem:[%s5 + $0x18] sm:$0xf]
    %v174 = vld [vmem:[%s5 + $0x1c] sm:$0xf]
    %v183 = vunpack.c.l.b16 %v167
    %v184 = vunpack.c.l.b16 %v168
    %v185 = vunpack.c.l.b16 %v169
    %v186 = vunpack.c.l.b16 %v170
    %v187 = vunpack.c.l.b16 %v171
    %v188 = vunpack.c.l.b16 %v172
    %v189 = vunpack.c.l.b16 %v173
    %v190 = vunpack.c.l.b16 %v174
    %v191 = vpack.c.b16 %v184, %v183
    %v192 = vpack.c.b16 %v186, %v185
    %v193 = vpack.c.b16 %v188, %v187
    %v194 = vpack.c.b16 %v190, %v189
    %vm199 = vcmask 523264
    %v201 = vsel %vm199, %v166, 0
    %203 = vmatprep.subr.bf16.mxu0 0
    %204 = vmatpush1.bf16.msra.mxu0 %v191
    %205 = vmatprep.subr.bf16.mxu0 0
    %206 = vmatpush1.bf16.msra.mxu0 %v192
    %207 = vmatprep.subr.bf16.mxu0 0
    %208 = vmatpush1.bf16.msra.mxu0 %v193
    %209 = vmatprep.subr.bf16.mxu0 0
    %210 = vmatpush1.bf16.msra.mxu0 %v194
    %211 = vmatprep.subr.bf16.mxu0 0
    %212 = vmatpush1.bf16.msra.mxu0 0
    %213 = vmatprep.subr.bf16.mxu0 0
    %214 = vmatpush1.bf16.msra.mxu0 0
    %215 = vmatprep.subr.bf16.mxu0 0
    %216 = vmatpush1.bf16.msra.mxu0 0
    %217 = vmatprep.subr.bf16.mxu0 0
    %218 = vmatpush1.bf16.msra.mxu0 0
    %219 = vmatprep.subr.bf16.mxu0 0
    %220 = vmatpush1.bf16.msra.mxu0 0
    %221 = vmatprep.subr.bf16.mxu0 0
    %222 = vmatpush1.bf16.msra.mxu0 0
    %223 = vmatprep.subr.bf16.mxu0 0
    %224 = vmatpush1.bf16.msra.mxu0 0
    %225 = vmatprep.subr.bf16.mxu0 0
    %226 = vmatpush1.bf16.msra.mxu0 0
    %227 = vmatprep.subr.bf16.mxu0 0
    %228 = vmatpush1.bf16.msra.mxu0 0
    %229 = vmatprep.subr.bf16.mxu0 0
    %230 = vmatpush1.bf16.msra.mxu0 0
    %231 = vmatprep.subr.bf16.mxu0 0
    %232 = vmatpush1.bf16.msra.mxu0 0
    %233 = vmatprep.subr.bf16.mxu0 0
    %234 = vmatpush1.bf16.msra.mxu0 0
    %235 = vmatprep.mubr.bf16.mxu0 0
    %236 = vmatmul.mubr.bf16.gmra.mrb[0].mxu0 %v201
    %v237 = vpop.f32.mrb[0].mxu0
    %v238 = vadd.f32 0.0, %v237
    %v239 = vpop.f32.mrb[0].mxu0
    %v240 = vpop.f32.mrb[0].mxu0
    %v241 = vpop.f32.mrb[0].mxu0
    %242 = vdwg.mxu0
    %v243 = vpack.c.bf16 %v238, %v238
    %v244 = vld [vmem:[%s6] sm:$0x1]
    %v246 = vpack.i.b16 %v244, %v244
    %v248 = vlaneseq
    %v249 = vshrl.u32 %v248, 7
    %v250 = vsub.s32 0, %v249
    %v251 = vrot.slane %v246, %v250
    %v252 = vadd.bf16 %v243, %v251
    %v253 = vtanh.bf16.pop %v252
    %v254 = vld [vmem:[%s7] sm:$0xf]
    %v255 = vld [vmem:[%s7 + $0x4] sm:$0xf]
    %v256 = vld [vmem:[%s7 + $0x8] sm:$0xf]
    %v257 = vld [vmem:[%s7 + $0xc] sm:$0xf]
    %v258 = vld [vmem:[%s7 + $0x10] sm:$0xf]
    %v259 = vld [vmem:[%s7 + $0x14] sm:$0xf]
    %v260 = vld [vmem:[%s7 + $0x18] sm:$0xf]
    %v261 = vld [vmem:[%s7 + $0x1c] sm:$0xf]
    %v262 = vld [vmem:[%s7 + $0x20] sm:$0xf]
    %v263 = vld [vmem:[%s7 + $0x24] sm:$0xf]
    %v264 = vld [vmem:[%s7 + $0x28] sm:$0xf]
    %v265 = vld [vmem:[%s7 + $0x2c] sm:$0xf]
    %v266 = vld [vmem:[%s7 + $0x30] sm:$0xf]
    %v267 = vld [vmem:[%s7 + $0x34] sm:$0xf]
    %v268 = vld [vmem:[%s7 + $0x38] sm:$0xf]
    %v269 = vld [vmem:[%s7 + $0x3c] sm:$0xf]
    %v270 = vld [vmem:[%s8] sm:$0x1]
    %v272 = vlaneseq
    %v273 = vshrl.u32 %v272, 7
    %v274 = vsub.s32 0, %v273
    %v275 = vrot.slane %v270, %v274
    %v293 = vunpack.c.l.b16 %v254
    %v294 = vunpack.c.l.b16 %v255
    %v295 = vunpack.c.l.b16 %v256
    %v296 = vunpack.c.l.b16 %v257
    %v297 = vunpack.c.l.b16 %v258
    %v298 = vunpack.c.l.b16 %v259
    %v299 = vunpack.c.l.b16 %v260
    %v300 = vunpack.c.l.b16 %v261
    %v301 = vunpack.c.l.b16 %v262
    %v302 = vunpack.c.l.b16 %v263
    %v303 = vunpack.c.l.b16 %v264
    %v304 = vunpack.c.l.b16 %v265
    %v305 = vunpack.c.l.b16 %v266
    %v306 = vunpack.c.l.b16 %v267
    %v307 = vunpack.c.l.b16 %v268
    %v308 = vunpack.c.l.b16 %v269
    %v309 = vpack.c.b16 %v294, %v293
    %v310 = vpack.c.b16 %v296, %v295
    %v311 = vpack.c.b16 %v298, %v297
    %v312 = vpack.c.b16 %v300, %v299
    %v313 = vpack.c.b16 %v302, %v301
    %v314 = vpack.c.b16 %v304, %v303
    %v315 = vpack.c.b16 %v306, %v305
    %v316 = vpack.c.b16 %v308, %v307
    %325 = vmatprep.subr.bf16.mxu0 0
    %326 = vmatpush1.bf16.msra.mxu0 %v309
    %327 = vmatprep.subr.bf16.mxu0 0
    %328 = vmatpush1.bf16.msra.mxu0 %v310
    %329 = vmatprep.subr.bf16.mxu0 0
    %330 = vmatpush1.bf16.msra.mxu0 %v311
    %331 = vmatprep.subr.bf16.mxu0 0
    %332 = vmatpush1.bf16.msra.mxu0 %v312
    %333 = vmatprep.subr.bf16.mxu0 0
    %334 = vmatpush1.bf16.msra.mxu0 %v313
    %335 = vmatprep.subr.bf16.mxu0 0
    %336 = vmatpush1.bf16.msra.mxu0 %v314
    %337 = vmatprep.subr.bf16.mxu0 0
    %338 = vmatpush1.bf16.msra.mxu0 %v315
    %339 = vmatprep.subr.bf16.mxu0 0
    %340 = vmatpush1.bf16.msra.mxu0 %v316
    %341 = vmatprep.subr.bf16.mxu0 0
    %342 = vmatpush1.bf16.msra.mxu0 0
    %343 = vmatprep.subr.bf16.mxu0 0
    %344 = vmatpush1.bf16.msra.mxu0 0
    %345 = vmatprep.subr.bf16.mxu0 0
    %346 = vmatpush1.bf16.msra.mxu0 0
    %347 = vmatprep.subr.bf16.mxu0 0
    %348 = vmatpush1.bf16.msra.mxu0 0
    %349 = vmatprep.subr.bf16.mxu0 0
    %350 = vmatpush1.bf16.msra.mxu0 0
    %351 = vmatprep.subr.bf16.mxu0 0
    %352 = vmatpush1.bf16.msra.mxu0 0
    %353 = vmatprep.subr.bf16.mxu0 0
    %354 = vmatpush1.bf16.msra.mxu0 0
    %355 = vmatprep.subr.bf16.mxu0 0
    %356 = vmatpush1.bf16.msra.mxu0 0
    %357 = vmatprep.mubr.bf16.mxu0 0
    %358 = vmatmul.mubr.bf16.gmra.mrb[0].mxu0 %v253
    %v359 = vpop.f32.mrb[0].mxu0
    %v360 = vadd.f32 %v275, %v359
    %v361 = vpop.f32.mrb[0].mxu0
    %v362 = vpop.f32.mrb[0].mxu0
    %v363 = vpop.f32.mrb[0].mxu0
    %364 = vdwg.mxu0
    %365 = vst.msk [vmem:[#allocation2] sm:$0xff] %vm199, %v360
    // Predicated region
    $region38: #{tpu_custom_call.1} parent=1 // pred_check
      _
    $region39: #{tpu_custom_call.1} parent=1 // pred_check_branch
      %367 = sbr.rel (0) target = $region41
    $region40: #{tpu_custom_call.1} parent=1 // pred_region
      %s369 = ssub.s32 128, 128
      %370 = vsyncadd [#allocation3], %s369
      %s372 = sshll.u32 [#allocation2], 4
      %s373 = int_to_ptr.vmem [resolvable:$true] %s372
      %375 = dma.vmem_to_hbm [thread:$0]  %s373, 128, %s9, [#allocation3]
    $region41: #{tpu_custom_call.1} parent=1 // pred_fallthru
      _
    // Predicated region
    $region42: #{tpu_custom_call.1} parent=1 // pred_check
      _
    $region43: #{tpu_custom_call.1} parent=1 // pred_check_branch
      %377 = sbr.rel (0) target = $region45
    $region44: #{tpu_custom_call.1} parent=1 // pred_region
      %378 = dma.done [#allocation3], 128
    $region45: #{tpu_custom_call.1} parent=1 // pred_fallthru
      _
    %379 = vsyncpa [#allocation3], 1

</llo_original>
